<compile_context>
chip_gen: v7x
topology: tpu7x:2x2x1
jax: 0.10.0
libtpu: 0.0.40
codegen_flags: <defaults>
</compile_context>

<pallas_src>
import functools

import numpy as np
import jax
import jax.numpy as jnp
from jax.experimental import pallas as pl
from jax.experimental.pallas import tpu as pltpu

TM = 128                     # voxel (output-lane) tile width; keep 128 (review)
TN = 512                     # point-chunk length along the lane-dense point axis
FEAT_DTYPE = jnp.bfloat16    # MXU operand dtype (jnp.float32 for full precision)
SENTINEL = np.iinfo(np.int32).max  # linear id for invalid points (sorts last)


def _round_up(x, m):
    return ((x + m - 1) // m) * m


def _next_pow2(x):
    x = int(x)
    return 1 if x <= 1 else 1 << (x - 1).bit_length()


def _scatter_mean_kernel(chunk_ids_ref, tile_ids_ref, inv_ref, feat_ref, out_ref,
                         *, tm, tn, empty_chunk):
    """One (voxel-tile, point-chunk) visit.

    chunk_ids_ref, tile_ids_ref : SMEM (G_cap,) int32 visit list (scalar prefetch).
    inv_ref  : VMEM (1, TN) int32  -- point -> voxel slot for this chunk (sorted).
    feat_ref : VMEM (CP, TN) bf16  -- transposed features; row C is all-ones
               (point counter), remaining rows / padded columns are zero.
    out_ref  : VMEM (CP, TM) f32   -- per-voxel feature sums + count row; stays
               resident across consecutive visits of the same tile.
    """
    g = pl.program_id(0)
    t = tile_ids_ref[g]
    prev_t = tile_ids_ref[jnp.maximum(g - 1, 0)]
    first = jnp.logical_or(g == 0, t != prev_t)

    @pl.when(first)
    def _init():
        out_ref[...] = jnp.zeros_like(out_ref)

    # Padded visits point at the guaranteed-empty last chunk; skip their work.
    @pl.when(chunk_ids_ref[g] != empty_chunk)
    def _accumulate():
        feat = feat_ref[...]                                           # (CP, TN)
        # One-hot membership: mask[v, p] = (slot[p] == t*TM + v).
        lane_slot = t * tm + jax.lax.broadcasted_iota(jnp.int32, (tm, tn), 0)
        mask = (inv_ref[...] == lane_slot).astype(feat.dtype)          # (TM, TN)
        # (CP, TN) x (TM, TN)^T -> (CP, TM): feature sums + counts in one matmul.
        out_ref[...] += jax.lax.dot_general(
            feat, mask, (((1,), (1,)), ((), ())),
            preferred_element_type=jnp.float32)


def voxel_segment_sums(featsT, inv_row, chunk_ids, tile_ids, m_cap):
    """featsT (CP, n_cap) FEAT_DTYPE, inv_row (1, n_cap) int32,
    chunk_ids / tile_ids (G_cap,) int32 tile-major visit list.
    Returns (CP, m_cap) f32: rows [:C] are per-voxel feature sums, row C counts."""
    CP, n_cap = featsT.shape
    G_cap = chunk_ids.shape[0]
    empty_chunk = n_cap // TN - 1

    kernel = functools.partial(_scatter_mean_kernel,
                               tm=TM, tn=TN, empty_chunk=empty_chunk)

    # VMEM footprint: 2x(CP,TN) bf16 + 2x(8,TN) i32 + 2x(CP,TM) f32 ~ 100 KiB,
    # well under the default scoped VMEM limit on v5e/v6e/v7x (no explicit
    # vmem_limit_bytes needed after the streaming restructure).
    return pl.pallas_call(
        kernel,
        out_shape=jax.ShapeDtypeStruct((CP, m_cap), jnp.float32),
        grid_spec=pltpu.PrefetchScalarGridSpec(
            num_scalar_prefetch=2,
            grid=(G_cap,),
            in_specs=[
                pl.BlockSpec((1, TN), lambda g, ci, ti: (0, ci[g])),
                pl.BlockSpec((CP, TN), lambda g, ci, ti: (0, ci[g])),
            ],
            out_specs=pl.BlockSpec((CP, TM), lambda g, ci, ti: (0, ti[g])),
        ),
        compiler_params=pltpu.CompilerParams(
            # The single grid axis carries the per-tile output accumulator.
            # TODO(synk): a v7x 2-TC split needs an outer "parallel" axis over
            # disjoint halves of the visit list; not done here.
            dimension_semantics=("arbitrary",)),
    )(chunk_ids, tile_ids, inv_row, featsT)


class DynamicSimpleVFE:
    """JAX/Pallas port of mmdet3d DynamicSimpleVFE (DynamicScatter, mean=True)."""

    def __init__(self, voxel_size=(0.2, 0.2, 4),
                 point_cloud_range=(0, -40, -3, 70.4, 40, 1)):
        self.voxel_size = voxel_size
        self.point_cloud_range = point_cloud_range
        self.grid = (
            int(round((point_cloud_range[3] - point_cloud_range[0]) / voxel_size[0])),  # Dx
            int(round((point_cloud_range[4] - point_cloud_range[1]) / voxel_size[1])),  # Dy
            int(round((point_cloud_range[5] - point_cloud_range[2]) / voxel_size[2])),  # Dz
        )
        self.fp16_enabled = False  # force_fp32 is a no-op with fp16 disabled: f32 output

    def __call__(self, features, coors):
        # features: (N, C) float; coors: (N, 4) int32 (batch, z, y, x)
        N, C = features.shape
        Dx, Dy, Dz = self.grid
        coors = coors.astype(jnp.int32)

        valid = jnp.all(coors >= 0, axis=1)
        lin = (((coors[:, 0] * Dz + coors[:, 1]) * Dy + coors[:, 2]) * Dx + coors[:, 3])
        lin = jnp.where(valid, lin, SENTINEL)

        # Single sort; unique ids and inverse indices derived from the same order
        # (review: previously jnp.unique + a second argsort).
        order = jnp.argsort(lin)
        lin_s = lin[order]
        feats_s = features[order]
        valid_s = valid[order]

        new_flag = jnp.concatenate(
            [jnp.ones((1,), jnp.bool_), lin_s[1:] != lin_s[:-1]])
        inv_raw = jnp.cumsum(new_flag.astype(jnp.int32)) - 1      # sorted slot per point

        # TODO(synk): one host sync remains -- the voxel count must be concrete to
        # return the dynamic (M, C)/(M, 4) outputs of the torch module.
        num_voxels = int(jnp.sum(new_flag & valid_s))

        # Bucketed static capacities -> small, reusable set of Mosaic compiles.
        m_cap = max(TM, _next_pow2(max(num_voxels, 1)))
        n_bucket = max(TN, _next_pow2(max(N, 1)))
        n_cap = n_bucket + TN          # last chunk guaranteed all-padding (no-op visits)
        CP = _round_up(C + 1, 16 if FEAT_DTYPE == jnp.bfloat16 else 8)
        num_tiles = m_cap // TM
        empty_chunk = n_cap // TN - 1

        # Invalid points -> slot m_cap: outside every voxel tile, never accumulated.
        inv_s = jnp.where(valid_s, inv_raw, m_cap)

        # Transposed lane-dense features with a fused ones row (point counter);
        # padded columns are zero features / slot m_cap.
        f_ext = jnp.concatenate(
            [feats_s.astype(FEAT_DTYPE), jnp.ones((N, 1), FEAT_DTYPE)], axis=1).T
        featsT = jnp.pad(f_ext, ((0, CP - (C + 1)), (0, n_cap - N)))       # (CP, n_cap)
        inv_row = jnp.pad(inv_s[None, :], ((0, 0), (0, n_cap - N)),
                          constant_values=m_cap)                           # (1, n_cap)

        # ---- tile-major (voxel-tile, point-chunk) visit list ----
        tile_lo = jnp.arange(num_tiles, dtype=jnp.int32) * TM
        pt_lo = jnp.searchsorted(inv_s, tile_lo, side='left')
        pt_hi = jnp.searchsorted(inv_s, tile_lo + TM, side='left')
        start_chunk = (pt_lo // TN).astype(jnp.int32)
        end_chunk = ((pt_hi + TN - 1) // TN).astype(jnp.int32)
        n_chunks = jnp.where(pt_hi > pt_lo, end_chunk - start_chunk, 0).astype(jnp.int32)

        ends = jnp.cumsum(n_chunks)
        starts = ends - n_chunks
        total = ends[-1]                               # real visits (device scalar)
        G_cap = n_cap // TN + num_tiles                # static bound on #visits

        gs = jnp.arange(G_cap, dtype=jnp.int32)
        raw_tile = jnp.searchsorted(ends, gs, side='right').astype(jnp.int32)
        last_tile = jnp.minimum(
            jnp.searchsorted(ends, jnp.maximum(total - 1, 0), side='right'),
            num_tiles - 1).astype(jnp.int32)
        # Padded visits keep the last real tile (no spurious init/writeback) and
        # point at the empty chunk (zero contribution, skipped in-kernel).
        tile_ids = jnp.where(gs < total, raw_tile, last_tile)
        chunk_ids = jnp.where(
            gs < total, start_chunk[tile_ids] + (gs - starts[tile_ids]),
            empty_chunk).astype(jnp.int32)

        acc = voxel_segment_sums(featsT, inv_row, chunk_ids, tile_ids, m_cap)

        counts = acc[C, :num_voxels]
        sums = acc[:C, :num_voxels]
        # Exact f32 division by counts (no approx reciprocal; empty slots can't occur).
        vox_feats = (sums / jnp.maximum(counts, 1.0)[None, :]).T.astype(jnp.float32)

        # Per-voxel linear ids (any representative point of each slot) -> coords.
        # TODO(synk): CUDA DynamicScatter returns voxels in first-appearance order;
        # here they are sorted by linearized coordinate (same set, same means).
        vox_lin = jnp.zeros((m_cap,), jnp.int32).at[inv_s].set(lin_s, mode='drop')
        uids = vox_lin[:num_voxels]
        plane = Dy * Dx
        vol = Dz * plane
        b = uids // vol
        r = uids - b * vol
        z = r // plane
        r = r - z * plane
        y = r // Dx
        x = r - y * Dx
        vox_coors = jnp.stack([b, z, y, x], axis=1).astype(jnp.int32)
        return vox_feats, vox_coors


if __name__ == "__main__":
    key = jax.random.PRNGKey(0)
    k1, k2, k3 = jax.random.split(key, 3)

    N, C = 200, 4
    features = jax.random.normal(k1, (N, C), jnp.float32)
    bidx = jax.random.randint(k2, (N, 1), 0, 2)          # batch index in {0, 1}
    yx = jax.random.randint(k3, (N, 2), 0, 16)           # small y/x range -> duplicates
    z = jnp.zeros((N, 1), jnp.int32)
    coors = jnp.concatenate([bidx, z, yx[:, :1], yx[:, 1:]], axis=1).astype(jnp.int32)
    coors = coors.at[:3].set(-1)                         # a few out-of-range points

    vfe = DynamicSimpleVFE()
    vox_feats, vox_coors = vfe(features, coors)
    jax.block_until_ready((vox_feats, vox_coors))

    # ---- numpy reference (segment mean, sorted by (b, z, y, x)) ----
    f = np.asarray(features)
    c = np.asarray(coors)
    keep = (c >= 0).all(axis=1)
    sums, cnts = {}, {}
    for feat, co in zip(f[keep], c[keep]):
        t = tuple(int(v) for v in co)
        if t not in sums:
            sums[t] = np.zeros(C, np.float64)
            cnts[t] = 0
        sums[t] += feat
        cnts[t] += 1
    ref_keys = sorted(sums.keys())
    ref_feats = np.stack([sums[k] / cnts[k] for k in ref_keys]).astype(np.float32)
    ref_coors = np.array(ref_keys, dtype=np.int32)

    assert vox_feats.shape == ref_feats.shape, (vox_feats.shape, ref_feats.shape)
    np.testing.assert_array_equal(np.asarray(vox_coors), ref_coors)
    # bf16 MXU operands: feature means carry bf16 input rounding (~3 sig digits).
    np.testing.assert_allclose(np.asarray(vox_feats), ref_feats, rtol=1e-2, atol=1e-2)

    print("KERNEL_OK")
</pallas_src>

<mosaic_0001>
module attributes {stable_mosaic.version = 11 : i64} {
  func.func @_scatter_mean_kernel(%arg0: i32, %arg1: memref<4xi32, #tpu.memory_space<smem>>, %arg2: memref<4xi32, #tpu.memory_space<smem>>, %arg3: memref<1x512xi32, #tpu.memory_space<vmem>>, %arg4: memref<16x512xbf16, #tpu.memory_space<vmem>>, %arg5: memref<16x128xf32, #tpu.memory_space<vmem>>) attributes {dimension_semantics = [#tpu.dimension_semantics<arbitrary>], iteration_bounds = array<i64: 4>, scalar_prefetch = 2 : i64, scratch_operands = 0 : i64, tpu.core_type = #tpu.core_type<tc>, window_params = [{transform_indices = @transform_0, window_bounds = array<i64: 1, 512>}, {transform_indices = @transform_1, window_bounds = array<i64: 16, 512>}, {transform_indices = @transform_2, window_bounds = array<i64: 16, 128>}]} {
    %0 = arith.index_cast %arg0 : i32 to index
    %1 = memref.load %arg2[%0] : memref<4xi32, #tpu.memory_space<smem>>
    %c1_i32 = arith.constant 1 : i32
    %2 = arith.subi %arg0, %c1_i32 : i32
    %c0_i32 = arith.constant 0 : i32
    %3 = arith.maxsi %2, %c0_i32 : i32
    %4 = arith.index_cast %3 : i32 to index
    %5 = memref.load %arg2[%4] : memref<4xi32, #tpu.memory_space<smem>>
    %c0_i32_0 = arith.constant 0 : i32
    %6 = arith.cmpi eq, %arg0, %c0_i32_0 : i32
    %7 = arith.cmpi ne, %1, %5 : i32
    %8 = arith.ori %6, %7 : i1
    %9 = arith.extui %8 : i1 to i32
    %c0_i32_1 = arith.constant 0 : i32
    %10 = arith.cmpi ne, %9, %c0_i32_1 : i32
    scf.if %10 {
      %cst = arith.constant 0.000000e+00 : f32
      %16 = vector.broadcast %cst : f32 to vector<16x128xf32>
      %c0 = arith.constant 0 : index
      %c0_4 = arith.constant 0 : index
      %17 = vector.load %arg5[%c0, %c0_4] : memref<16x128xf32, #tpu.memory_space<vmem>>, vector<16x128xf32>
      tpu.vector_store %arg5[%c0, %c0_4], %16 {strides = array<i32>} : memref<16x128xf32, #tpu.memory_space<vmem>>, vector<16x128xf32>,
    } else {
    }
    %11 = arith.index_cast %arg0 : i32 to index
    %12 = memref.load %arg1[%11] : memref<4xi32, #tpu.memory_space<smem>>
    %c1_i32_2 = arith.constant 1 : i32
    %13 = arith.cmpi ne, %12, %c1_i32_2 : i32
    %14 = arith.extui %13 : i1 to i32
    %c0_i32_3 = arith.constant 0 : i32
    %15 = arith.cmpi ne, %14, %c0_i32_3 : i32
    scf.if %15 {
      %c0 = arith.constant 0 : index
      %c0_4 = arith.constant 0 : index
      %16 = vector.load %arg4[%c0, %c0_4] : memref<16x512xbf16, #tpu.memory_space<vmem>>, vector<16x512xbf16>
      %c128_i32 = arith.constant 128 : i32
      %17 = arith.muli %1, %c128_i32 : i32
      %18 = tpu.iota {dimensions = array<i32: 0>} : vector<128x512xi32>
      %19 = vector.broadcast %17 : i32 to vector<128x512xi32>
      %20 = arith.addi %19, %18 : vector<128x512xi32>
      %c0_5 = arith.constant 0 : index
      %c0_6 = arith.constant 0 : index
      %21 = vector.load %arg3[%c0_5, %c0_6] : memref<1x512xi32, #tpu.memory_space<vmem>>, vector<1x512xi32>
      %22 = vector.broadcast %21 : vector<1x512xi32> to vector<128x512xi32>
      %23 = arith.cmpi eq, %22, %20 : vector<128x512xi32>
      %24 = arith.extui %23 : vector<128x512xi1> to vector<128x512xi32>
      %25 = arith.sitofp %24 : vector<128x512xi32> to vector<128x512xf32>
      %26 = arith.truncf %25 : vector<128x512xf32> to vector<128x512xbf16>
      %c0_7 = arith.constant 0 : index
      %c0_8 = arith.constant 0 : index
      %27 = vector.load %arg5[%c0_7, %c0_8] : memref<16x128xf32, #tpu.memory_space<vmem>>, vector<16x128xf32>
      %cst = arith.constant dense<0.000000e+00> : vector<16x128xf32>
      %28 = tpu.matmul %16, %26, %cst {dimension_numbers = #tpu.dot_dimension_numbers<[1], [1], [0], [0], [0, 0, 1, 0], [], []>} : vector<16x512xbf16>, vector<128x512xbf16>, vector<16x128xf32> -> vector<16x128xf32>
      %29 = arith.addf %27, %28 : vector<16x128xf32>
      %c0_9 = arith.constant 0 : index
      %c0_10 = arith.constant 0 : index
      %30 = vector.load %arg5[%c0_9, %c0_10] : memref<16x128xf32, #tpu.memory_space<vmem>>, vector<16x128xf32>
      tpu.vector_store %arg5[%c0_9, %c0_10], %29 {strides = array<i32>} : memref<16x128xf32, #tpu.memory_space<vmem>>, vector<16x128xf32>,
    } else {
    }
    return
  }
  func.func @transform_0(%arg0: i32, %arg1: memref<4xi32, #tpu.memory_space<smem>>, %arg2: memref<4xi32, #tpu.memory_space<smem>>) -> (i32, i32) {
    %0 = arith.index_cast %arg0 : i32 to index
    %1 = memref.load %arg1[%0] : memref<4xi32, #tpu.memory_space<smem>>
    %c0_i32 = arith.constant 0 : i32
    %c0_i32_0 = arith.constant 0 : i32
    return %c0_i32, %1 : i32, i32
  }
  func.func @transform_1(%arg0: i32, %arg1: memref<4xi32, #tpu.memory_space<smem>>, %arg2: memref<4xi32, #tpu.memory_space<smem>>) -> (i32, i32) {
    %0 = arith.index_cast %arg0 : i32 to index
    %1 = memref.load %arg1[%0] : memref<4xi32, #tpu.memory_space<smem>>
    %c0_i32 = arith.constant 0 : i32
    %c0_i32_0 = arith.constant 0 : i32
    return %c0_i32, %1 : i32, i32
  }
  func.func @transform_2(%arg0: i32, %arg1: memref<4xi32, #tpu.memory_space<smem>>, %arg2: memref<4xi32, #tpu.memory_space<smem>>) -> (i32, i32) {
    %0 = arith.index_cast %arg0 : i32 to index
    %1 = memref.load %arg2[%0] : memref<4xi32, #tpu.memory_space<smem>>
    %c0_i32 = arith.constant 0 : i32
    %c0_i32_0 = arith.constant 0 : i32
    return %c0_i32, %1 : i32, i32
  }
}

</mosaic_0001>

<llo_original>
// kernel: tpu_custom_call.1
$region0: #{tpu_custom_call.1}
  #allocation0 [shape = 'u32[]', space=smem, size = 0x4, offset = 0x4, fixed_abs, tag = 'smem constant byte address 0x4 - core index']
  #allocation1 [shape = 'u32[144,128]{1,0:T(1,128)}', space=vmem, size = 0x12000, scoped, tag = 'internal scratch']
  #allocation2 [shape = 's32[1]{0}', space=sflag, size = 0x4, scoped, tag = 'scoped memory for tpu_custom_call.1']
  #allocation3 [shape = 'u8[512]{0}', space=smem, size = 0x200, scoped, tag = 'prefetched SMEM operand 0']
  #allocation4 [shape = 'u8[512]{0}', space=smem, size = 0x200, scoped, tag = 'prefetched SMEM operand 1']
  %s0 = inlined_call_operand.hbm [shape: s32[4], index: 0, kind: input, shape index: {}]
  %s1 = inlined_call_operand.vmem [shape: s32[4], index: 1, kind: input, shape index: {}]
  %s2 = inlined_call_operand.hbm [shape: s32[1,1024], index: 2, kind: input, shape index: {}]
  %s3 = inlined_call_operand.hbm [shape: bf16[16,1024], index: 3, kind: input, shape index: {}]
  %s4 = inlined_call_operand.hbm [shape: f32[16,256], index: 4, kind: output, shape index: {}]
  %s5 = sld [smem:[#allocation0]]
  $region57: #{tpu_custom_call.1} parent=0
    _
  %s7 = ssub.s32 1, %s5
  %s8 = scalar_select 0, %s7, %s5
  %10 = dma.hbm_to_smem %s0, 16, [#allocation3], [#allocation2]
  %s11 = sshll.u32 %s1, 4
  %s12 = int_to_ptr.vmem [resolvable:$true] %s11
  %14 = dma.vmem_to_smem %s12, 16, [#allocation4], [#allocation2]
  %15 = dma.done [#allocation2], 32
  %16 = sfence
  $region1: #{tpu_custom_call.1} parent=0
    #allocation5 [shape = 'u8[4096]{0}', space=vmem, size = 0x1000, scoped, tag = 'input window, operand 2']
    #allocation6 [shape = 's32[2]{0}', space=sflag, size = 0x8, scoped, tag = 'scoped memory for tpu_custom_call.1']
    #allocation7 [shape = 's32[2]{0}', space=sflag, size = 0x8, scoped, tag = 'scoped memory for tpu_custom_call.1']
    #allocation8 [shape = 'u8[32768]{0}', space=vmem, size = 0x8000, scoped, tag = 'input window, operand 3']
    #allocation9 [shape = 's32[2]{0}', space=sflag, size = 0x8, scoped, tag = 'scoped memory for tpu_custom_call.1']
    #allocation10 [shape = 'u8[16384]{0}', space=vmem, size = 0x4000, scoped, tag = 'output window, operand 0']
    %17 = vsyncpa [#allocation6], 0
    %s18 = scalar_lea.sflag [#allocation6], 1
    %19 = vsyncpa %s18, 0
    %20 = vsyncpa [#allocation9], 0
    %s21 = scalar_lea.sflag [#allocation9], 1
    %22 = vsyncpa %s21, 0
    %23 = vsyncpa [#allocation7], 0
    %s24 = scalar_lea.sflag [#allocation7], 1
    %25 = vsyncpa %s24, 0
    loop: start=0, step=1, limit=6
    $region2: #{tpu_custom_call.1} parent=1 // loop_pre_header
      _
    $region3: #{tpu_custom_call.1} parent=1 // loop_header
      %s27 = sphi 0, %s31
      %p28 = scmp.ge.s32.totalorder %s27, 6
      %s39 = sphi 0, %s41
      %s42 = sphi 0, %s39
      %s43 = sphi 0, %s42
      %s59 = sphi 0, %s43
      %s67 = sphi 0, %s69
      %s70 = sphi 0, %s67
      %s71 = sphi 0, %s70
      %s87 = sphi 0, %s71
      %s95 = sphi 0, %s97
      %s98 = sphi 0, %s95
      %s99 = sphi 0, %s98
      %s115 = sphi 0, %s99
    $region4: #{tpu_custom_call.1} parent=1 // loop_header_branch
      %30 = sbr.rel (%p28) target = $region8
    $region5: #{tpu_custom_call.1} parent=1 // loop_body
      %s32 = ssub.s32 %s27, 1
      %s33 = ssub.s32 %s27, 2
      %s34 = sadd.s32 %s27, 1
      %s35 = sld [smem:[#allocation3 + %s27]]
      %s36 = sld [smem:[#allocation3 + %s34]]
      %s37 = ssub.s32 %s35, %s36
      %p38 = scmp.eq.s32.totalorder %s37, 0
      %s40 = sadd.s32 %s39, 1
      %s41 = scalar_select %p38, %s39, %s40
      %p44 = pneg %p38
      %p45 = scmp.eq.s32.totalorder %s27, 3
      %p46 = por %p44, %p45
      %p47 = scmp.ne.s32.totalorder %s39, %s42
      %p48 = scmp.eq.s32.totalorder %s27, 0
      %p49 = por %p47, %p48
      %p50 = scmp.ne.s32.totalorder %s39, %s42
      %p51 = scmp.eq.s32.totalorder %s32, 3
      %p52 = por %p50, %p51
      %p53 = scmp.ne.s32.totalorder %s42, %s43
      %p54 = scmp.eq.s32.totalorder %s32, 0
      %p55 = por %p53, %p54
      %p56 = scmp.ne.s32.totalorder %s42, %s43
      %p57 = scmp.eq.s32.totalorder %s33, 3
      %p58 = por %p56, %p57
      %p60 = scmp.ne.s32.totalorder %s43, %s59
      %p61 = scmp.eq.s32.totalorder %s33, 0
      %p62 = por %p60, %p61
      %s63 = sld [smem:[#allocation3 + %s27]]
      %s64 = sld [smem:[#allocation3 + %s34]]
      %s65 = ssub.s32 %s63, %s64
      %p66 = scmp.eq.s32.totalorder %s65, 0
      %s68 = sadd.s32 %s67, 1
      %s69 = scalar_select %p66, %s67, %s68
      %p72 = pneg %p66
      %p73 = scmp.eq.s32.totalorder %s27, 3
      %p74 = por %p72, %p73
      %p75 = scmp.ne.s32.totalorder %s67, %s70
      %p76 = scmp.eq.s32.totalorder %s27, 0
      %p77 = por %p75, %p76
      %p78 = scmp.ne.s32.totalorder %s67, %s70
      %p79 = scmp.eq.s32.totalorder %s32, 3
      %p80 = por %p78, %p79
      %p81 = scmp.ne.s32.totalorder %s70, %s71
      %p82 = scmp.eq.s32.totalorder %s32, 0
      %p83 = por %p81, %p82
      %p84 = scmp.ne.s32.totalorder %s70, %s71
      %p85 = scmp.eq.s32.totalorder %s33, 3
      %p86 = por %p84, %p85
      %p88 = scmp.ne.s32.totalorder %s71, %s87
      %p89 = scmp.eq.s32.totalorder %s33, 0
      %p90 = por %p88, %p89
      %s91 = sld [smem:[#allocation4 + %s27]]
      %s92 = sld [smem:[#allocation4 + %s34]]
      %s93 = ssub.s32 %s91, %s92
      %p94 = scmp.eq.s32.totalorder %s93, 0
      %s96 = sadd.s32 %s95, 1
      %s97 = scalar_select %p94, %s95, %s96
      %p100 = pneg %p94
      %p101 = scmp.eq.s32.totalorder %s27, 3
      %p102 = por %p100, %p101
      %p103 = scmp.ne.s32.totalorder %s95, %s98
      %p104 = scmp.eq.s32.totalorder %s27, 0
      %p105 = por %p103, %p104
      %p106 = scmp.ne.s32.totalorder %s95, %s98
      %p107 = scmp.eq.s32.totalorder %s32, 3
      %p108 = por %p106, %p107
      %p109 = scmp.ne.s32.totalorder %s98, %s99
      %p110 = scmp.eq.s32.totalorder %s32, 0
      %p111 = por %p109, %p110
      %p112 = scmp.ne.s32.totalorder %s98, %s99
      %p113 = scmp.eq.s32.totalorder %s33, 3
      %p114 = por %p112, %p113
      %p116 = scmp.ne.s32.totalorder %s99, %s115
      %p117 = scmp.eq.s32.totalorder %s33, 0
      %p118 = por %p116, %p117
      %p119 = scmp.le.s32.totalorder 1, %s27
      %p120 = scmp.lt.s32.totalorder %s27, 5
      %p121 = pnand %p119, %p120
      %p122 = pneg %p121
      // Predicated region
      $region9: #{tpu_custom_call.1} parent=5 // pred_check
        _
      $region10: #{tpu_custom_call.1} parent=5 // pred_check_branch
        %124 = sbr.rel (%p121) target = $region12
      $region11: #{tpu_custom_call.1} parent=5 // pred_region
        %s125 = ssub.s32 %s27, 1
      $region12: #{tpu_custom_call.1} parent=5 // pred_fallthru
        _
      %p126 = scmp.lt.s32.totalorder %s27, 4
      // Predicated region
      $region13: #{tpu_custom_call.1} parent=5 // pred_check
        %p127 = pneg %p126
      $region14: #{tpu_custom_call.1} parent=5 // pred_check_branch
        %129 = sbr.rel (%p127) target = $region16
      $region15: #{tpu_custom_call.1} parent=5 // pred_region
        // Predicated region
        $region17: #{tpu_custom_call.1} parent=15 // pred_check
          %p130 = pneg %p49
        $region18: #{tpu_custom_call.1} parent=15 // pred_check_branch
          %132 = sbr.rel (%p130) target = $region20
        $region19: #{tpu_custom_call.1} parent=15 // pred_region
          %s133 = sand.u32 %s39, 1
          %s134 = scalar_lea.sflag [#allocation6], %s133
          %s135 = sand.u32 %s39, 1
          %s136 = smul.addr %s135, 4
          %s137 = scalar_lea.vmem [#allocation5], %s136
          %s138 = sld [smem:[#allocation3 + %s27]]
          %s139 = smul.u32 4, %s138
          %s141 = ssub.s32 64, 64
          %142 = vsyncadd %s134, %s141
          %s143 = smul.addr %s139, 16
          %s144 = scalar_lea.hbm %s2, %s143
          %s146 = sshll.u32 %s137, 4
          %s147 = int_to_ptr.vmem [resolvable:$true] %s146
          %149 = dma.hbm_to_vmem [thread:$0]  %s144, 64, %s147, %s134
        $region20: #{tpu_custom_call.1} parent=15 // pred_fallthru
          _
        // Predicated region
        $region21: #{tpu_custom_call.1} parent=15 // pred_check
          %p150 = pneg %p77
        $region22: #{tpu_custom_call.1} parent=15 // pred_check_branch
          %152 = sbr.rel (%p150) target = $region24
        $region23: #{tpu_custom_call.1} parent=15 // pred_region
          %s153 = sand.u32 %s67, 1
          %s154 = scalar_lea.sflag [#allocation9], %s153
          %s155 = sand.u32 %s67, 1
          %s156 = smul.addr %s155, 32
          %s157 = scalar_lea.vmem [#allocation8], %s156
          %s158 = sld [smem:[#allocation3 + %s27]]
          %s159 = smul.u32 4, %s158
          %s161 = ssub.s32 512, 512
          %162 = vsyncadd %s154, %s161
          %s163 = smul.addr %s159, 64
          %s164 = scalar_lea.hbm %s3, %s163
          %s165 = sshll.u32 %s157, 4
          %s166 = int_to_ptr.vmem [resolvable:$true] %s165
          %171 = dma.hbm_to_vmem [thread:$0]  %s164, 512, %s166, %s154, 512, 256, 16
        $region24: #{tpu_custom_call.1} parent=15 // pred_fallthru
          _
      $region16: #{tpu_custom_call.1} parent=5 // pred_fallthru
        _
      %p172 = scmp.le.s32.totalorder 1, %s27
      %p173 = scmp.lt.s32.totalorder %s27, 5
      %p174 = pnand %p172, %p173
      %p175 = pneg %p174
      // Predicated region
      $region25: #{tpu_custom_call.1} parent=5 // pred_check
        _
      $region26: #{tpu_custom_call.1} parent=5 // pred_check_branch
        %177 = sbr.rel (%p174) target = $region28
      $region27: #{tpu_custom_call.1} parent=5 // pred_region
        %s178 = ssub.s32 %s27, 1
        %s179 = sand.u32 %s42, 1
        %s180 = scalar_lea.sflag [#allocation6], %s179
        %s181 = sand.u32 %s42, 1
        %s182 = smul.addr %s181, 4
        %s183 = scalar_lea.vmem [#allocation5], %s182
        // Predicated region
        $region29: #{tpu_custom_call.1} parent=27 // pred_check
          %p184 = pneg %p55
        $region30: #{tpu_custom_call.1} parent=27 // pred_check_branch
          %186 = sbr.rel (%p184) target = $region32
        $region31: #{tpu_custom_call.1} parent=27 // pred_region
          %187 = dma.done %s180, 64
        $region32: #{tpu_custom_call.1} parent=27 // pred_fallthru
          _
        %s188 = sand.u32 %s70, 1
        %s189 = scalar_lea.sflag [#allocation9], %s188
        %s190 = sand.u32 %s70, 1
        %s191 = smul.addr %s190, 32
        %s192 = scalar_lea.vmem [#allocation8], %s191
        // Predicated region
        $region33: #{tpu_custom_call.1} parent=27 // pred_check
          %p193 = pneg %p83
        $region34: #{tpu_custom_call.1} parent=27 // pred_check_branch
          %195 = sbr.rel (%p193) target = $region36
        $region35: #{tpu_custom_call.1} parent=27 // pred_region
          %196 = dma.done %s189, 512
        $region36: #{tpu_custom_call.1} parent=27 // pred_fallthru
          _
        %s197 = sand.u32 %s42, 1
        %s198 = scalar_lea.sflag [#allocation6], %s197
        %s199 = sand.u32 %s42, 1
        %s200 = smul.addr %s199, 4
        %s201 = scalar_lea.vmem [#allocation5], %s200
        %p202 = pneg %p55
        %p203 = pneg %p52
        %s204 = sand.u32 %s70, 1
        %s205 = scalar_lea.sflag [#allocation9], %s204
        %s206 = sand.u32 %s70, 1
        %s207 = smul.addr %s206, 32
        %s208 = scalar_lea.vmem [#allocation8], %s207
        %p209 = pneg %p83
        %p210 = pneg %p80
        %p211 = pneg %p111
        %p212 = pneg %p108
        %s213 = sand.u32 %s98, 1
        %s214 = scalar_lea.sflag [#allocation7], %s213
        %s215 = sand.u32 %s98, 1
        %s216 = smul.addr %s215, 16
        %s217 = scalar_lea.vmem [#allocation10], %s216
        %s218 = sld [smem:[#allocation3 + %s32]]
        %s219 = smul.u32 4, %s218
        %s220 = sld [smem:[#allocation3 + %s32]]
        %s221 = smul.u32 4, %s220
        %s222 = sld [smem:[#allocation4 + %s32]]
        %s224 = sld [smem:[#allocation4 + %s32]]
        %s225 = ssub.s32 %s32, 1
        %p226 = scmp.gt.s32.totalorder %s225, 0
        %s227 = scalar_select %p226, %s225, 0
        %s228 = sld [smem:[#allocation4 + %s227]]
        %p229 = scmp.eq.s32.totalorder %s32, 0
        %p230 = scmp.ne.s32.totalorder %s224, %s228
        %p231 = por %p229, %p230
        // Predicated region
        $region37: #{tpu_custom_call.1} parent=27 // pred_check
          %p232 = pneg %p231
        $region38: #{tpu_custom_call.1} parent=27 // pred_check_branch
          %234 = sbr.rel (%p232) target = $region40
        $region39: #{tpu_custom_call.1} parent=27 // pred_region
          %235 = vst [vmem:[%s217] sm:$0xff] 0.0
          %236 = vst [vmem:[%s217 + $0x8] sm:$0xff] 0.0
        $region40: #{tpu_custom_call.1} parent=27 // pred_fallthru
          _
        %s237 = sld [smem:[#allocation3 + %s32]]
        %p238 = scmp.ne.s32.totalorder %s237, 1
        // Predicated region
        $region41: #{tpu_custom_call.1} parent=27 // pred_check
          %p239 = pneg %p238
        $region42: #{tpu_custom_call.1} parent=27 // pred_check_branch
          %241 = sbr.rel (%p239) target = $region44
        $region43: #{tpu_custom_call.1} parent=27 // pred_region
          %v242 = vld [vmem:[%s192] sm:$0xff]
          %v243 = vld [vmem:[%s192 + $0x8] sm:$0xff]
          %v244 = vld [vmem:[%s192 + $0x10] sm:$0xff]
          %v245 = vld [vmem:[%s192 + $0x18] sm:$0xff]
          %s246 = smul.u32 %s224, 128
          %v247 = vlaneseq
          %v248 = vshrl.u32 %v247, 7
          %v249 = vadd.s32 %v248, 8
          %v250 = vadd.s32 %v248, 16
          %v251 = vadd.s32 %v248, 24
          %v252 = vadd.s32 %v248, 32
          %v253 = vadd.s32 %v248, 40
          %v254 = vadd.s32 %v248, 48
          %v255 = vadd.s32 %v248, 56
          %v256 = vadd.s32 %v248, 64
          %v257 = vadd.s32 %v248, 72
          %v258 = vadd.s32 %v248, 80
          %v259 = vadd.s32 %v248, 88
          %v260 = vadd.s32 %v248, 96
          %v261 = vadd.s32 %v248, 104
          %v262 = vadd.s32 %v248, 112
          %v263 = vadd.s32 %v248, 120
          %v264 = vstv %s246
          %v265 = vadd.s32 %v264, %v248
          %v266 = vadd.s32 %v264, %v249
          %v267 = vadd.s32 %v264, %v250
          %v268 = vadd.s32 %v264, %v251
          %v269 = vadd.s32 %v264, %v252
          %v270 = vadd.s32 %v264, %v253
          %v271 = vadd.s32 %v264, %v254
          %v272 = vadd.s32 %v264, %v255
          %v273 = vadd.s32 %v264, %v256
          %v274 = vadd.s32 %v264, %v257
          %v275 = vadd.s32 %v264, %v258
          %v276 = vadd.s32 %v264, %v259
          %v277 = vadd.s32 %v264, %v260
          %v278 = vadd.s32 %v264, %v261
          %v279 = vadd.s32 %v264, %v262
          %v280 = vadd.s32 %v264, %v263
          %v281 = vld [vmem:[%s183] sm:$0xf]
          %v282 = vlaneseq
          %v283 = vshrl.u32 %v282, 7
          %v284 = vsub.s32 0, %v283
          %v285 = vrot.slane %v281, %v284
          %v286 = vlaneseq
          %v287 = vshrl.u32 %v286, 7
          %v288 = vsub.s32 1, %v287
          %v289 = vrot.slane %v281, %v288
          %v290 = vlaneseq
          %v291 = vshrl.u32 %v290, 7
          %v292 = vsub.s32 2, %v291
          %v293 = vrot.slane %v281, %v292
          %v294 = vlaneseq
          %v295 = vshrl.u32 %v294, 7
          %v296 = vsub.s32 3, %v295
          %v297 = vrot.slane %v281, %v296
          %vm298 = vcmp.eq.s32.totalorder %v285, %v265
          %vm299 = vcmp.eq.s32.totalorder %v289, %v265
          %vm300 = vcmp.eq.s32.totalorder %v293, %v265
          %vm301 = vcmp.eq.s32.totalorder %v297, %v265
          %vm302 = vcmp.eq.s32.totalorder %v285, %v266
          %vm303 = vcmp.eq.s32.totalorder %v289, %v266
          %vm304 = vcmp.eq.s32.totalorder %v293, %v266
          %vm305 = vcmp.eq.s32.totalorder %v297, %v266
          %vm306 = vcmp.eq.s32.totalorder %v285, %v267
          %vm307 = vcmp.eq.s32.totalorder %v289, %v267
          %vm308 = vcmp.eq.s32.totalorder %v293, %v267
          %vm309 = vcmp.eq.s32.totalorder %v297, %v267
          %vm310 = vcmp.eq.s32.totalorder %v285, %v268
          %vm311 = vcmp.eq.s32.totalorder %v289, %v268
          %vm312 = vcmp.eq.s32.totalorder %v293, %v268
          %vm313 = vcmp.eq.s32.totalorder %v297, %v268
          %vm314 = vcmp.eq.s32.totalorder %v285, %v269
          %vm315 = vcmp.eq.s32.totalorder %v289, %v269
          %vm316 = vcmp.eq.s32.totalorder %v293, %v269
          %vm317 = vcmp.eq.s32.totalorder %v297, %v269
          %vm318 = vcmp.eq.s32.totalorder %v285, %v270
          %vm319 = vcmp.eq.s32.totalorder %v289, %v270
          %vm320 = vcmp.eq.s32.totalorder %v293, %v270
          %vm321 = vcmp.eq.s32.totalorder %v297, %v270
          %vm322 = vcmp.eq.s32.totalorder %v285, %v271
          %vm323 = vcmp.eq.s32.totalorder %v289, %v271
          %vm324 = vcmp.eq.s32.totalorder %v293, %v271
          %vm325 = vcmp.eq.s32.totalorder %v297, %v271
          %vm326 = vcmp.eq.s32.totalorder %v285, %v272
          %vm327 = vcmp.eq.s32.totalorder %v289, %v272
          %vm328 = vcmp.eq.s32.totalorder %v293, %v272
          %vm329 = vcmp.eq.s32.totalorder %v297, %v272
          %vm330 = vcmp.eq.s32.totalorder %v285, %v273
          %vm331 = vcmp.eq.s32.totalorder %v289, %v273
          %vm332 = vcmp.eq.s32.totalorder %v293, %v273
          %vm333 = vcmp.eq.s32.totalorder %v297, %v273
          %vm334 = vcmp.eq.s32.totalorder %v285, %v274
          %vm335 = vcmp.eq.s32.totalorder %v289, %v274
          %vm336 = vcmp.eq.s32.totalorder %v293, %v274
          %vm337 = vcmp.eq.s32.totalorder %v297, %v274
          %vm338 = vcmp.eq.s32.totalorder %v285, %v275
          %vm339 = vcmp.eq.s32.totalorder %v289, %v275
          %vm340 = vcmp.eq.s32.totalorder %v293, %v275
          %vm341 = vcmp.eq.s32.totalorder %v297, %v275
          %vm342 = vcmp.eq.s32.totalorder %v285, %v276
          %vm343 = vcmp.eq.s32.totalorder %v289, %v276
          %vm344 = vcmp.eq.s32.totalorder %v293, %v276
          %vm345 = vcmp.eq.s32.totalorder %v297, %v276
          %vm346 = vcmp.eq.s32.totalorder %v285, %v277
          %vm347 = vcmp.eq.s32.totalorder %v289, %v277
          %vm348 = vcmp.eq.s32.totalorder %v293, %v277
          %vm349 = vcmp.eq.s32.totalorder %v297, %v277
          %vm350 = vcmp.eq.s32.totalorder %v285, %v278
          %vm351 = vcmp.eq.s32.totalorder %v289, %v278
          %vm352 = vcmp.eq.s32.totalorder %v293, %v278
          %vm353 = vcmp.eq.s32.totalorder %v297, %v278
          %vm354 = vcmp.eq.s32.totalorder %v285, %v279
          %vm355 = vcmp.eq.s32.totalorder %v289, %v279
          %vm356 = vcmp.eq.s32.totalorder %v293, %v279
          %vm357 = vcmp.eq.s32.totalorder %v297, %v279
          %vm358 = vcmp.eq.s32.totalorder %v285, %v280
          %vm359 = vcmp.eq.s32.totalorder %v289, %v280
          %vm360 = vcmp.eq.s32.totalorder %v293, %v280
          %vm361 = vcmp.eq.s32.totalorder %v297, %v280
          %v362 = vsel %vm298, 1, 0
          %v363 = vsel %vm299, 1, 0
          %v364 = vsel %vm300, 1, 0
          %v365 = vsel %vm301, 1, 0
          %v366 = vsel %vm302, 1, 0
          %v367 = vsel %vm303, 1, 0
          %v368 = vsel %vm304, 1, 0
          %v369 = vsel %vm305, 1, 0
          %v370 = vsel %vm306, 1, 0
          %v371 = vsel %vm307, 1, 0
          %v372 = vsel %vm308, 1, 0
          %v373 = vsel %vm309, 1, 0
          %v374 = vsel %vm310, 1, 0
          %v375 = vsel %vm311, 1, 0
          %v376 = vsel %vm312, 1, 0
          %v377 = vsel %vm313, 1, 0
          %v378 = vsel %vm314, 1, 0
          %v379 = vsel %vm315, 1, 0
          %v380 = vsel %vm316, 1, 0
          %v381 = vsel %vm317, 1, 0
          %v382 = vsel %vm318, 1, 0
          %v383 = vsel %vm319, 1, 0
          %v384 = vsel %vm320, 1, 0
          %v385 = vsel %vm321, 1, 0
          %v386 = vsel %vm322, 1, 0
          %v387 = vsel %vm323, 1, 0
          %v388 = vsel %vm324, 1, 0
          %v389 = vsel %vm325, 1, 0
          %v390 = vsel %vm326, 1, 0
          %v391 = vsel %vm327, 1, 0
          %v392 = vsel %vm328, 1, 0
          %v393 = vsel %vm329, 1, 0
          %v394 = vsel %vm330, 1, 0
          %v395 = vsel %vm331, 1, 0
          %v396 = vsel %vm332, 1, 0
          %v397 = vsel %vm333, 1, 0
          %v398 = vsel %vm334, 1, 0
          %v399 = vsel %vm335, 1, 0
          %v400 = vsel %vm336, 1, 0
          %v401 = vsel %vm337, 1, 0
          %v402 = vsel %vm338, 1, 0
          %v403 = vsel %vm339, 1, 0
          %v404 = vsel %vm340, 1, 0
          %v405 = vsel %vm341, 1, 0
          %v406 = vsel %vm342, 1, 0
          %v407 = vsel %vm343, 1, 0
          %v408 = vsel %vm344, 1, 0
          %v409 = vsel %vm345, 1, 0
          %v410 = vsel %vm346, 1, 0
          %v411 = vsel %vm347, 1, 0
          %v412 = vsel %vm348, 1, 0
          %v413 = vsel %vm349, 1, 0
          %v414 = vsel %vm350, 1, 0
          %v415 = vsel %vm351, 1, 0
          %v416 = vsel %vm352, 1, 0
          %v417 = vsel %vm353, 1, 0
          %v418 = vsel %vm354, 1, 0
          %v419 = vsel %vm355, 1, 0
          %v420 = vsel %vm356, 1, 0
          %v421 = vsel %vm357, 1, 0
          %v422 = vsel %vm358, 1, 0
          %v423 = vsel %vm359, 1, 0
          %v424 = vsel %vm360, 1, 0
          %v425 = vsel %vm361, 1, 0
          %v426 = vcvt.s32.f32 %v362
          %v427 = vcvt.s32.f32 %v363
          %v428 = vcvt.s32.f32 %v364
          %v429 = vcvt.s32.f32 %v365
          %v430 = vcvt.s32.f32 %v366
          %v431 = vcvt.s32.f32 %v367
          %v432 = vcvt.s32.f32 %v368
          %v433 = vcvt.s32.f32 %v369
          %v434 = vcvt.s32.f32 %v370
          %v435 = vcvt.s32.f32 %v371
          %v436 = vcvt.s32.f32 %v372
          %v437 = vcvt.s32.f32 %v373
          %v438 = vcvt.s32.f32 %v374
          %v439 = vcvt.s32.f32 %v375
          %v440 = vcvt.s32.f32 %v376
          %v441 = vcvt.s32.f32 %v377
          %v442 = vcvt.s32.f32 %v378
          %v443 = vcvt.s32.f32 %v379
          %v444 = vcvt.s32.f32 %v380
          %v445 = vcvt.s32.f32 %v381
          %v446 = vcvt.s32.f32 %v382
          %v447 = vcvt.s32.f32 %v383
          %v448 = vcvt.s32.f32 %v384
          %v449 = vcvt.s32.f32 %v385
          %v450 = vcvt.s32.f32 %v386
          %v451 = vcvt.s32.f32 %v387
          %v452 = vcvt.s32.f32 %v388
          %v453 = vcvt.s32.f32 %v389
          %v454 = vcvt.s32.f32 %v390
          %v455 = vcvt.s32.f32 %v391
          %v456 = vcvt.s32.f32 %v392
          %v457 = vcvt.s32.f32 %v393
          %v458 = vcvt.s32.f32 %v394
          %v459 = vcvt.s32.f32 %v395
          %v460 = vcvt.s32.f32 %v396
          %v461 = vcvt.s32.f32 %v397
          %v462 = vcvt.s32.f32 %v398
          %v463 = vcvt.s32.f32 %v399
          %v464 = vcvt.s32.f32 %v400
          %v465 = vcvt.s32.f32 %v401
          %v466 = vcvt.s32.f32 %v402
          %v467 = vcvt.s32.f32 %v403
          %v468 = vcvt.s32.f32 %v404
          %v469 = vcvt.s32.f32 %v405
          %v470 = vcvt.s32.f32 %v406
          %v471 = vcvt.s32.f32 %v407
          %v472 = vcvt.s32.f32 %v408
          %v473 = vcvt.s32.f32 %v409
          %v474 = vcvt.s32.f32 %v410
          %v475 = vcvt.s32.f32 %v411
          %v476 = vcvt.s32.f32 %v412
          %v477 = vcvt.s32.f32 %v413
          %v478 = vcvt.s32.f32 %v414
          %v479 = vcvt.s32.f32 %v415
          %v480 = vcvt.s32.f32 %v416
          %v481 = vcvt.s32.f32 %v417
          %v482 = vcvt.s32.f32 %v418
          %v483 = vcvt.s32.f32 %v419
          %v484 = vcvt.s32.f32 %v420
          %v485 = vcvt.s32.f32 %v421
          %v486 = vcvt.s32.f32 %v422
          %v487 = vcvt.s32.f32 %v423
          %v488 = vcvt.s32.f32 %v424
          %v489 = vcvt.s32.f32 %v425
          %v490 = vpack.c.bf16 %v430, %v426
          %v491 = vpack.c.bf16 %v431, %v427
          %v492 = vpack.c.bf16 %v432, %v428
          %v493 = vpack.c.bf16 %v433, %v429
          %v494 = vpack.c.bf16 %v438, %v434
          %v495 = vpack.c.bf16 %v439, %v435
          %v496 = vpack.c.bf16 %v440, %v436
          %v497 = vpack.c.bf16 %v441, %v437
          %v498 = vpack.c.bf16 %v446, %v442
          %v499 = vpack.c.bf16 %v447, %v443
          %v500 = vpack.c.bf16 %v448, %v444
          %v501 = vpack.c.bf16 %v449, %v445
          %v502 = vpack.c.bf16 %v454, %v450
          %v503 = vpack.c.bf16 %v455, %v451
          %v504 = vpack.c.bf16 %v456, %v452
          %v505 = vpack.c.bf16 %v457, %v453
          %v506 = vpack.c.bf16 %v462, %v458
          %v507 = vpack.c.bf16 %v463, %v459
          %v508 = vpack.c.bf16 %v464, %v460
          %v509 = vpack.c.bf16 %v465, %v461
          %v510 = vpack.c.bf16 %v470, %v466
          %v511 = vpack.c.bf16 %v471, %v467
          %v512 = vpack.c.bf16 %v472, %v468
          %v513 = vpack.c.bf16 %v473, %v469
          %v514 = vpack.c.bf16 %v478, %v474
          %v515 = vpack.c.bf16 %v479, %v475
          %v516 = vpack.c.bf16 %v480, %v476
          %v517 = vpack.c.bf16 %v481, %v477
          %v518 = vpack.c.bf16 %v486, %v482
          %v519 = vpack.c.bf16 %v487, %v483
          %v520 = vpack.c.bf16 %v488, %v484
          %v521 = vpack.c.bf16 %v489, %v485
          %v522 = vld [vmem:[%s217] sm:$0xff]
          %v523 = vld [vmem:[%s217 + $0x8] sm:$0xff]
          %v528 = vunpack.c.l.b16 %v242
          %v529 = vunpack.c.h.b16 %v242
          %v530 = vunpack.c.l.b16 %v243
          %v531 = vunpack.c.h.b16 %v243
          %v532 = vunpack.c.l.b16 %v244
          %v533 = vunpack.c.h.b16 %v244
          %v534 = vunpack.c.l.b16 %v245
          %v535 = vunpack.c.h.b16 %v245
          %v536 = vpack.c.b16 %v532, %v528
          %v537 = vpack.c.b16 %v533, %v529
          %v538 = vpack.c.b16 %v534, %v530
          %v539 = vpack.c.b16 %v535, %v531
          %544 = vmatprep.subr.bf16.mxu0 %v491
          %545 = vmatpush1.bf16.xpose.msra.mxu0 %v490
          %546 = vmatprep.subr.bf16.mxu0 %v495
          %547 = vmatpush1.bf16.xpose.msra.mxu0 %v494
          %548 = vmatprep.subr.bf16.mxu0 %v499
          %549 = vmatpush1.bf16.xpose.msra.mxu0 %v498
          %550 = vmatprep.subr.bf16.mxu0 %v503
          %551 = vmatpush1.bf16.xpose.msra.mxu0 %v502
          %552 = vmatprep.subr.bf16.mxu0 %v507
          %553 = vmatpush1.bf16.xpose.msra.mxu0 %v506
          %554 = vmatprep.subr.bf16.mxu0 %v511
          %555 = vmatpush1.bf16.xpose.msra.mxu0 %v510
          %556 = vmatprep.subr.bf16.mxu0 %v515
          %557 = vmatpush1.bf16.xpose.msra.mxu0 %v514
          %558 = vmatprep.subr.bf16.mxu0 %v519
          %559 = vmatpush1.bf16.xpose.msra.mxu0 %v518
          %560 = vmatprep.subr.bf16.mxu0 0
          %561 = vmatpush1.bf16.xpose.msra.mxu0 0
          %562 = vmatprep.subr.bf16.mxu0 0
          %563 = vmatpush1.bf16.xpose.msra.mxu0 0
          %564 = vmatprep.subr.bf16.mxu0 0
          %565 = vmatpush1.bf16.xpose.msra.mxu0 0
          %566 = vmatprep.subr.bf16.mxu0 0
          %567 = vmatpush1.bf16.xpose.msra.mxu0 0
          %568 = vmatprep.subr.bf16.mxu0 0
          %569 = vmatpush1.bf16.xpose.msra.mxu0 0
          %570 = vmatprep.subr.bf16.mxu0 0
          %571 = vmatpush1.bf16.xpose.msra.mxu0 0
          %572 = vmatprep.subr.bf16.mxu0 0
          %573 = vmatpush1.bf16.xpose.msra.mxu0 0
          %574 = vmatprep.subr.bf16.mxu0 0
          %575 = vmatpush1.bf16.xpose.msra.mxu0 0
          %576 = vmatprep.mubr.bf16.mxu0 %v537
          %577 = vmatmul.mubr.bf16.gmra.mrb[0].mxu0 %v536
          %v578 = vpop.f32.mrb[0].mxu0
          %v579 = vadd.f32 0.0, %v578
          %v580 = vpop.f32.mrb[0].mxu0
          %v581 = vpop.f32.mrb[0].mxu0
          %v582 = vadd.f32 0.0, %v581
          %v583 = vpop.f32.mrb[0].mxu0
          %584 = vdwg.mxu0
          %585 = vmatprep.subr.bf16.mxu0 %v493
          %586 = vmatpush1.bf16.xpose.msra.mxu0 %v492
          %587 = vmatprep.subr.bf16.mxu0 %v497
          %588 = vmatpush1.bf16.xpose.msra.mxu0 %v496
          %589 = vmatprep.subr.bf16.mxu0 %v501
          %590 = vmatpush1.bf16.xpose.msra.mxu0 %v500
          %591 = vmatprep.subr.bf16.mxu0 %v505
          %592 = vmatpush1.bf16.xpose.msra.mxu0 %v504
          %593 = vmatprep.subr.bf16.mxu0 %v509
          %594 = vmatpush1.bf16.xpose.msra.mxu0 %v508
          %595 = vmatprep.subr.bf16.mxu0 %v513
          %596 = vmatpush1.bf16.xpose.msra.mxu0 %v512
          %597 = vmatprep.subr.bf16.mxu0 %v517
          %598 = vmatpush1.bf16.xpose.msra.mxu0 %v516
          %599 = vmatprep.subr.bf16.mxu0 %v521
          %600 = vmatpush1.bf16.xpose.msra.mxu0 %v520
          %601 = vmatprep.subr.bf16.mxu0 0
          %602 = vmatpush1.bf16.xpose.msra.mxu0 0
          %603 = vmatprep.subr.bf16.mxu0 0
          %604 = vmatpush1.bf16.xpose.msra.mxu0 0
          %605 = vmatprep.subr.bf16.mxu0 0
          %606 = vmatpush1.bf16.xpose.msra.mxu0 0
          %607 = vmatprep.subr.bf16.mxu0 0
          %608 = vmatpush1.bf16.xpose.msra.mxu0 0
          %609 = vmatprep.subr.bf16.mxu0 0
          %610 = vmatpush1.bf16.xpose.msra.mxu0 0
          %611 = vmatprep.subr.bf16.mxu0 0
          %612 = vmatpush1.bf16.xpose.msra.mxu0 0
          %613 = vmatprep.subr.bf16.mxu0 0
          %614 = vmatpush1.bf16.xpose.msra.mxu0 0
          %615 = vmatprep.subr.bf16.mxu0 0
          %616 = vmatpush1.bf16.xpose.msra.mxu0 0
          %617 = vmatprep.mubr.bf16.mxu0 %v539
          %618 = vmatmul.mubr.bf16.gmra.mrb[0].mxu0 %v538
          %v619 = vpop.f32.mrb[0].mxu0
          %v620 = vadd.f32 %v579, %v619
          %v621 = vpop.f32.mrb[0].mxu0
          %v622 = vpop.f32.mrb[0].mxu0
          %v623 = vadd.f32 %v582, %v622
          %v624 = vpop.f32.mrb[0].mxu0
          %625 = vdwg.mxu0
          %v626 = vadd.f32 %v522, %v620
          %v627 = vadd.f32 %v523, %v623
          %628 = vst [vmem:[%s217] sm:$0xff] %v626
          %629 = vst [vmem:[%s217 + $0x8] sm:$0xff] %v627
        $region44: #{tpu_custom_call.1} parent=27 // pred_fallthru
          _
        %s630 = sand.u32 %s98, 1
        %s631 = scalar_lea.sflag [#allocation7], %s630
        %s632 = sand.u32 %s98, 1
        %s633 = smul.addr %s632, 16
        %s634 = scalar_lea.vmem [#allocation10], %s633
        // Predicated region
        $region45: #{tpu_custom_call.1} parent=27 // pred_check
          %p635 = pneg %p108
        $region46: #{tpu_custom_call.1} parent=27 // pred_check_branch
          %637 = sbr.rel (%p635) target = $region48
        $region47: #{tpu_custom_call.1} parent=27 // pred_region
          %s638 = sld [smem:[#allocation4 + %s32]]
          %s640 = ssub.s32 256, 256
          %641 = vsyncadd %s631, %s640
          %s642 = smul.addr %s638, 128
          %s643 = scalar_lea.hbm %s4, %s642
          %s644 = sshll.u32 %s634, 4
          %s645 = int_to_ptr.vmem [resolvable:$true] %s644
          %650 = dma.vmem_to_hbm [thread:$0]  %s645, 256, %s643, %s631, 128, 256, 8
        $region48: #{tpu_custom_call.1} parent=27 // pred_fallthru
          _
      $region28: #{tpu_custom_call.1} parent=5 // pred_fallthru
        _
      %p651 = scmp.le.s32.totalorder 2, %s27
      // Predicated region
      $region49: #{tpu_custom_call.1} parent=5 // pred_check
        %p652 = pneg %p651
      $region50: #{tpu_custom_call.1} parent=5 // pred_check_branch
        %654 = sbr.rel (%p652) target = $region52
      $region51: #{tpu_custom_call.1} parent=5 // pred_region
        %s655 = ssub.s32 %s27, 2
        // Predicated region
        $region53: #{tpu_custom_call.1} parent=51 // pred_check
          %p656 = pneg %p114
        $region54: #{tpu_custom_call.1} parent=51 // pred_check_branch
          %658 = sbr.rel (%p656) target = $region56
        $region55: #{tpu_custom_call.1} parent=51 // pred_region
          %s659 = sand.u32 %s99, 1
          %s660 = scalar_lea.sflag [#allocation7], %s659
          %s661 = sand.u32 %s99, 1
          %s662 = smul.addr %s661, 16
          %s663 = scalar_lea.vmem [#allocation10], %s662
          %664 = dma.done %s660, 256
        $region56: #{tpu_custom_call.1} parent=51 // pred_fallthru
          _
      $region52: #{tpu_custom_call.1} parent=5 // pred_fallthru
        _
    $region6: #{tpu_custom_call.1} parent=1 // loop_footer
      %s31 = sadd.s32 1, %s27
    $region7: #{tpu_custom_call.1} parent=1 // loop_footer_branch
      %26 = sbr.rel target = $region3
    $region8: #{tpu_custom_call.1} parent=1 // loop_exit
      _
    %665 = vsyncpa [#allocation6], 1
    %s666 = scalar_lea.sflag [#allocation6], 1
    %667 = vsyncpa %s666, 1
    %668 = vsyncpa [#allocation9], 1
    %s669 = scalar_lea.sflag [#allocation9], 1
    %670 = vsyncpa %s669, 1
    %671 = vsyncpa [#allocation7], 1
    %s672 = scalar_lea.sflag [#allocation7], 1
    %673 = vsyncpa %s672, 1

</llo_original>
